<compile_context>
chip_gen: v7x
topology: tpu7x:2x2x1
jax: 0.10.0
libtpu: 0.0.40
codegen_flags: <defaults>
</compile_context>

<pallas_src>
import functools

import jax
import jax.numpy as jnp
from jax.experimental import pallas as pl
from jax.experimental.pallas import tpu as pltpu


def _round_up(x, m):
    return ((x + m - 1) // m) * m


def make_next_char_kernel(block_size, vocab_size, num_layers, k0):
    """Fused tokens->logits MLP kernel for fixed (block_size, num_layers)."""

    def kernel(tok_ref, w_ref, b_ref, o_ref):
        # tok_ref: (Bt, T) int32        token ids (one batch tile)
        # w_ref  : (K0 + L*P, P) bf16   [M_0..M_{T-1} packed | W_1..W_{L-1} | W_out]
        # b_ref  : (L + 1, P) f32       [b_0..b_{L-1}, b_out]
        # o_ref  : (Bt, P) f32          padded logits
        Bt, P = o_ref.shape
        tok = tok_ref[...]                                         # (Bt, T)
        col = jax.lax.broadcasted_iota(jnp.int32, (Bt, k0), 1)     # column ids

        # One-hot over the repacked first-layer rows: row = tok[:, t] + t*V.
        # (T cheap VPU compares feeding a single MXU contraction.)
        onehot = jnp.zeros((Bt, k0), jnp.float32)
        for t in range(block_size):
            onehot = onehot + (
                col == (tok[:, t:t + 1] + t * vocab_size)).astype(jnp.float32)

        # Fused embedding + flatten + first Linear: one (Bt,K0)x(K0,P) dot.
        h = jnp.dot(onehot.astype(w_ref.dtype), w_ref[0:k0, :],
                    preferred_element_type=jnp.float32)
        h = jnp.maximum(h + b_ref[0:1, :], 0.0)                    # ReLU

        # Hidden layers 1 .. L-1 (128-aligned static slices of the slab).
        off = k0
        for i in range(1, num_layers):
            h = jnp.dot(h.astype(w_ref.dtype), w_ref[off:off + P, :],
                        preferred_element_type=jnp.float32) + b_ref[i:i + 1, :]
            h = jnp.maximum(h, 0.0)
            off += P

        # Output projection.
        o_ref[...] = (jnp.dot(h.astype(w_ref.dtype), w_ref[off:off + P, :],
                              preferred_element_type=jnp.float32)
                      + b_ref[num_layers:num_layers + 1, :])

    return kernel


def pack_params(params, *, block_size, vocab_size, emb_dim, hidden_size,
                num_layers, weight_dtype=jnp.bfloat16):
    """One-time parameter prep: fold emb into W0, repack at V-row offsets,
    pad to lane width, cast weights to bf16."""
    P = _round_up(max(hidden_size, vocab_size), 128)
    K0 = _round_up(block_size * vocab_size, 128)
    R = K0 + num_layers * P

    slab = jnp.zeros((R, P), jnp.float32)
    emb, w0 = params["emb"], params["w0"]
    for t in range(block_size):
        # Exact weight folding: M_t[v, :] = emb[v, :] @ W0[t*E:(t+1)*E, :]
        m_t = emb @ w0[t * emb_dim:(t + 1) * emb_dim, :]          # (V, H)
        slab = slab.at[t * vocab_size:(t + 1) * vocab_size,
                       :hidden_size].set(m_t)
    for i in range(1, num_layers):
        r0 = K0 + (i - 1) * P
        slab = slab.at[r0:r0 + hidden_size, :hidden_size].set(params[f"w{i}"])
    r0 = K0 + (num_layers - 1) * P
    slab = slab.at[r0:r0 + hidden_size, :vocab_size].set(params["w_out"])
    slab = slab.astype(weight_dtype)      # zero padding stays exactly zero

    biases = jnp.zeros((num_layers + 1, P), jnp.float32)
    for i in range(num_layers):
        biases = biases.at[i, :hidden_size].set(params[f"b{i}"])
    biases = biases.at[num_layers, :vocab_size].set(params["b_out"])

    return {"slab": slab, "bias": biases}


def next_char_forward(tokens, packed, *, block_size, num_layers, vocab_size,
                      batch_tile=256):
    """Pallas-backed forward pass matching NextChar.forward (tokens->logits)."""
    slab, biases = packed["slab"], packed["bias"]
    P = slab.shape[-1]
    K0 = slab.shape[0] - num_layers * P
    B = tokens.shape[0]

    # Pad the batch to a sublane multiple and tile it (parallel grid axis so
    # v7x's two TensorCores split large batches; weights stay resident).
    B8 = _round_up(B, 8)
    if B8 >= batch_tile:
        bt = batch_tile
        Bp = _round_up(B, bt)
    else:
        bt = B8
        Bp = B8
    if Bp != B:
        tokens = jnp.pad(tokens, ((0, Bp - B), (0, 0)))
    grid = (Bp // bt,)

    kernel = make_next_char_kernel(block_size, vocab_size, num_layers, K0)
    flops = 2 * Bp * P * (K0 + num_layers * P)
    bytes_accessed = (tokens.size * tokens.dtype.itemsize
                      + slab.size * slab.dtype.itemsize
                      + biases.size * biases.dtype.itemsize
                      + Bp * P * 4)

    # TODO(synk): if hidden_size is scaled up, tile the slab per-layer via a
    # grid axis + pl.Buffered(2) so it fits v7x's 64 MiB VMEM.
    logits_padded = pl.pallas_call(
        kernel,
        out_shape=jax.ShapeDtypeStruct((Bp, P), jnp.float32),
        grid=grid,
        in_specs=[
            pl.BlockSpec((bt, block_size), lambda b: (b, 0)),
            pl.BlockSpec(slab.shape, lambda b: (0, 0)),     # constant: resident
            pl.BlockSpec(biases.shape, lambda b: (0, 0)),   # constant: resident
        ],
        out_specs=pl.BlockSpec((bt, P), lambda b: (b, 0)),
        compiler_params=pltpu.CompilerParams(
            dimension_semantics=("parallel",)),
        cost_estimate=pl.CostEstimate(flops=flops, transcendentals=0,
                                      bytes_accessed=bytes_accessed),
    )(tokens, slab, biases)
    # Padded logit columns are exact zeros (zero-padded W_out / b_out); drop.
    return logits_padded[:B, :vocab_size]


def init_params(key, block_size, vocab_size, emb_dim, hidden_size, num_layers):
    """Deterministic synthetic parameters (shapes follow NextChar.__init__).

    Linear weights stored as (in_features, out_features): h @ W + b equals
    PyTorch's x @ W_t.T + b with W = W_t.T.  Biases are 1-D like nn.Linear.
    """
    n_keys = 1 + 2 * num_layers + 2
    keys = jax.random.split(key, n_keys)
    params = {}
    params["emb"] = jax.random.normal(keys[0], (vocab_size, emb_dim),
                                      dtype=jnp.float32) * 0.1
    in_dim = block_size * emb_dim
    k = 1
    for i in range(num_layers):
        d_in = in_dim if i == 0 else hidden_size
        params[f"w{i}"] = jax.random.normal(
            keys[k], (d_in, hidden_size), dtype=jnp.float32) * 0.1
        params[f"b{i}"] = jax.random.normal(
            keys[k + 1], (hidden_size,), dtype=jnp.float32) * 0.1
        k += 2
    params["w_out"] = jax.random.normal(
        keys[k], (hidden_size, vocab_size), dtype=jnp.float32) * 0.1
    params["b_out"] = jax.random.normal(
        keys[k + 1], (vocab_size,), dtype=jnp.float32) * 0.1
    return params


def reference_forward(tokens, params, *, num_layers):
    """Pure-JAX reference (unpadded, unfused, f32) for correctness check."""
    x = jnp.take(params["emb"], tokens, axis=0).reshape(tokens.shape[0], -1)
    for i in range(num_layers):
        x = jnp.maximum(x @ params[f"w{i}"] + params[f"b{i}"], 0.0)
    return x @ params["w_out"] + params["b_out"]


if __name__ == "__main__":
    block_size = 5
    vocab_size = 32
    emb_dim = 4
    hidden_size = 32
    num_layers = 3
    batch = 8

    key = jax.random.PRNGKey(0)
    pkey, xkey = jax.random.split(key)
    params = init_params(pkey, block_size, vocab_size, emb_dim,
                         hidden_size, num_layers)
    tokens = jax.random.randint(xkey, (batch, block_size), 0, vocab_size,
                                dtype=jnp.int32)

    # One-time parameter packing (weight folding + repack + bf16 cast),
    # outside the per-step hot path.
    packed = jax.tree_util.tree_map(
        jax.block_until_ready,
        pack_params(params, block_size=block_size, vocab_size=vocab_size,
                    emb_dim=emb_dim, hidden_size=hidden_size,
                    num_layers=num_layers))

    fwd = jax.jit(functools.partial(next_char_forward,
                                    block_size=block_size,
                                    num_layers=num_layers,
                                    vocab_size=vocab_size))
    out = jax.block_until_ready(fwd(tokens, packed))

    ref = reference_forward(tokens, params, num_layers=num_layers)
    assert out.shape == (batch, vocab_size)
    max_err = float(jnp.max(jnp.abs(out - ref)))
    # Tolerance loosened vs. the f32 version: weights are stored in bf16.
    assert jnp.allclose(out, ref, atol=2e-2, rtol=2e-2), (
        f"mismatch vs reference, max_abs_err={max_err}")

    print("KERNEL_OK")
</pallas_src>

<mosaic_0001>
module attributes {stable_mosaic.version = 11 : i64} {
  func.func @kernel(%arg0: i32, %arg1: memref<8x5xi32, #tpu.memory_space<vmem>>, %arg2: memref<640x128xbf16, #tpu.memory_space<vmem>>, %arg3: memref<4x128xf32, #tpu.memory_space<vmem>>, %arg4: memref<8x128xf32, #tpu.memory_space<vmem>>) attributes {dimension_semantics = [#tpu.dimension_semantics<parallel>], iteration_bounds = array<i64: 1>, scalar_prefetch = 0 : i64, scratch_operands = 0 : i64, tpu.core_type = #tpu.core_type<tc>, window_params = [{transform_indices = @transform_0, window_bounds = array<i64: 8, 5>}, {pipeline_mode = #tpu.pipeline_mode<synchronous>, transform_indices = @transform_1, window_bounds = array<i64: 640, 128>}, {pipeline_mode = #tpu.pipeline_mode<synchronous>, transform_indices = @transform_2, window_bounds = array<i64: 4, 128>}, {transform_indices = @transform_3, window_bounds = array<i64: 8, 128>}]} {
    %c0 = arith.constant 0 : index
    %c0_0 = arith.constant 0 : index
    %0 = vector.load %arg1[%c0, %c0_0] : memref<8x5xi32, #tpu.memory_space<vmem>>, vector<8x5xi32>
    %1 = tpu.iota {dimensions = array<i32: 1>} : vector<8x256xi32>
    %cst = arith.constant 0.000000e+00 : f32
    %2 = vector.broadcast %cst : f32 to vector<8x256xf32>
    %3 = vector.extract_strided_slice %0 {offsets = [0, 0], sizes = [8, 1], strides = [1, 1]} : vector<8x5xi32> to vector<8x1xi32>
    %c0_i32 = arith.constant 0 : i32
    %4 = vector.broadcast %c0_i32 : i32 to vector<8x1xi32>
    %5 = arith.addi %3, %4 : vector<8x1xi32>
    %6 = vector.broadcast %5 : vector<8x1xi32> to vector<8x256xi32>
    %7 = arith.cmpi eq, %1, %6 : vector<8x256xi32>
    %8 = arith.extui %7 : vector<8x256xi1> to vector<8x256xi32>
    %9 = arith.sitofp %8 : vector<8x256xi32> to vector<8x256xf32>
    %10 = arith.addf %2, %9 : vector<8x256xf32>
    %11 = vector.extract_strided_slice %0 {offsets = [0, 1], sizes = [8, 1], strides = [1, 1]} : vector<8x5xi32> to vector<8x1xi32>
    %c32_i32 = arith.constant 32 : i32
    %12 = vector.broadcast %c32_i32 : i32 to vector<8x1xi32>
    %13 = arith.addi %11, %12 : vector<8x1xi32>
    %14 = vector.broadcast %13 : vector<8x1xi32> to vector<8x256xi32>
    %15 = arith.cmpi eq, %1, %14 : vector<8x256xi32>
    %16 = arith.extui %15 : vector<8x256xi1> to vector<8x256xi32>
    %17 = arith.sitofp %16 : vector<8x256xi32> to vector<8x256xf32>
    %18 = arith.addf %10, %17 : vector<8x256xf32>
    %19 = vector.extract_strided_slice %0 {offsets = [0, 2], sizes = [8, 1], strides = [1, 1]} : vector<8x5xi32> to vector<8x1xi32>
    %c64_i32 = arith.constant 64 : i32
    %20 = vector.broadcast %c64_i32 : i32 to vector<8x1xi32>
    %21 = arith.addi %19, %20 : vector<8x1xi32>
    %22 = vector.broadcast %21 : vector<8x1xi32> to vector<8x256xi32>
    %23 = arith.cmpi eq, %1, %22 : vector<8x256xi32>
    %24 = arith.extui %23 : vector<8x256xi1> to vector<8x256xi32>
    %25 = arith.sitofp %24 : vector<8x256xi32> to vector<8x256xf32>
    %26 = arith.addf %18, %25 : vector<8x256xf32>
    %27 = vector.extract_strided_slice %0 {offsets = [0, 3], sizes = [8, 1], strides = [1, 1]} : vector<8x5xi32> to vector<8x1xi32>
    %c96_i32 = arith.constant 96 : i32
    %28 = vector.broadcast %c96_i32 : i32 to vector<8x1xi32>
    %29 = arith.addi %27, %28 : vector<8x1xi32>
    %30 = vector.broadcast %29 : vector<8x1xi32> to vector<8x256xi32>
    %31 = arith.cmpi eq, %1, %30 : vector<8x256xi32>
    %32 = arith.extui %31 : vector<8x256xi1> to vector<8x256xi32>
    %33 = arith.sitofp %32 : vector<8x256xi32> to vector<8x256xf32>
    %34 = arith.addf %26, %33 : vector<8x256xf32>
    %35 = vector.extract_strided_slice %0 {offsets = [0, 4], sizes = [8, 1], strides = [1, 1]} : vector<8x5xi32> to vector<8x1xi32>
    %c128_i32 = arith.constant 128 : i32
    %36 = vector.broadcast %c128_i32 : i32 to vector<8x1xi32>
    %37 = arith.addi %35, %36 : vector<8x1xi32>
    %38 = vector.broadcast %37 : vector<8x1xi32> to vector<8x256xi32>
    %39 = arith.cmpi eq, %1, %38 : vector<8x256xi32>
    %40 = arith.extui %39 : vector<8x256xi1> to vector<8x256xi32>
    %41 = arith.sitofp %40 : vector<8x256xi32> to vector<8x256xf32>
    %42 = arith.addf %34, %41 : vector<8x256xf32>
    %43 = arith.truncf %42 : vector<8x256xf32> to vector<8x256xbf16>
    %c0_1 = arith.constant 0 : index
    %c0_2 = arith.constant 0 : index
    %44 = vector.load %arg2[%c0_1, %c0_2] : memref<640x128xbf16, #tpu.memory_space<vmem>>, vector<256x128xbf16>
    %cst_3 = arith.constant dense<0.000000e+00> : vector<8x128xf32>
    %45 = tpu.matmul %43, %44, %cst_3 {dimension_numbers = #tpu.dot_dimension_numbers<[1], [0], [0], [1], [0, 0, 1, 1], [], []>} : vector<8x256xbf16>, vector<256x128xbf16>, vector<8x128xf32> -> vector<8x128xf32>
    %c0_4 = arith.constant 0 : index
    %c0_5 = arith.constant 0 : index
    %46 = vector.load %arg3[%c0_4, %c0_5] : memref<4x128xf32, #tpu.memory_space<vmem>>, vector<1x128xf32>
    %47 = vector.broadcast %46 : vector<1x128xf32> to vector<8x128xf32>
    %48 = arith.addf %45, %47 : vector<8x128xf32>
    %cst_6 = arith.constant 0.000000e+00 : f32
    %49 = vector.broadcast %cst_6 : f32 to vector<8x128xf32>
    %50 = arith.maximumf %48, %49 : vector<8x128xf32>
    %51 = arith.truncf %50 : vector<8x128xf32> to vector<8x128xbf16>
    %c256 = arith.constant 256 : index
    %c0_7 = arith.constant 0 : index
    %52 = vector.load %arg2[%c256, %c0_7] : memref<640x128xbf16, #tpu.memory_space<vmem>>, vector<128x128xbf16>
    %cst_8 = arith.constant dense<0.000000e+00> : vector<8x128xf32>
    %53 = tpu.matmul %51, %52, %cst_8 {dimension_numbers = #tpu.dot_dimension_numbers<[1], [0], [0], [1], [0, 0, 1, 1], [], []>} : vector<8x128xbf16>, vector<128x128xbf16>, vector<8x128xf32> -> vector<8x128xf32>
    %c1 = arith.constant 1 : index
    %c0_9 = arith.constant 0 : index
    %54 = vector.load %arg3[%c1, %c0_9] : memref<4x128xf32, #tpu.memory_space<vmem>>, vector<1x128xf32>
    %55 = vector.broadcast %54 : vector<1x128xf32> to vector<8x128xf32>
    %56 = arith.addf %53, %55 : vector<8x128xf32>
    %cst_10 = arith.constant 0.000000e+00 : f32
    %57 = vector.broadcast %cst_10 : f32 to vector<8x128xf32>
    %58 = arith.maximumf %56, %57 : vector<8x128xf32>
    %59 = arith.truncf %58 : vector<8x128xf32> to vector<8x128xbf16>
    %c384 = arith.constant 384 : index
    %c0_11 = arith.constant 0 : index
    %60 = vector.load %arg2[%c384, %c0_11] : memref<640x128xbf16, #tpu.memory_space<vmem>>, vector<128x128xbf16>
    %cst_12 = arith.constant dense<0.000000e+00> : vector<8x128xf32>
    %61 = tpu.matmul %59, %60, %cst_12 {dimension_numbers = #tpu.dot_dimension_numbers<[1], [0], [0], [1], [0, 0, 1, 1], [], []>} : vector<8x128xbf16>, vector<128x128xbf16>, vector<8x128xf32> -> vector<8x128xf32>
    %c2 = arith.constant 2 : index
    %c0_13 = arith.constant 0 : index
    %62 = vector.load %arg3[%c2, %c0_13] : memref<4x128xf32, #tpu.memory_space<vmem>>, vector<1x128xf32>
    %63 = vector.broadcast %62 : vector<1x128xf32> to vector<8x128xf32>
    %64 = arith.addf %61, %63 : vector<8x128xf32>
    %cst_14 = arith.constant 0.000000e+00 : f32
    %65 = vector.broadcast %cst_14 : f32 to vector<8x128xf32>
    %66 = arith.maximumf %64, %65 : vector<8x128xf32>
    %67 = arith.truncf %66 : vector<8x128xf32> to vector<8x128xbf16>
    %c512 = arith.constant 512 : index
    %c0_15 = arith.constant 0 : index
    %68 = vector.load %arg2[%c512, %c0_15] : memref<640x128xbf16, #tpu.memory_space<vmem>>, vector<128x128xbf16>
    %cst_16 = arith.constant dense<0.000000e+00> : vector<8x128xf32>
    %69 = tpu.matmul %67, %68, %cst_16 {dimension_numbers = #tpu.dot_dimension_numbers<[1], [0], [0], [1], [0, 0, 1, 1], [], []>} : vector<8x128xbf16>, vector<128x128xbf16>, vector<8x128xf32> -> vector<8x128xf32>
    %c3 = arith.constant 3 : index
    %c0_17 = arith.constant 0 : index
    %70 = vector.load %arg3[%c3, %c0_17] : memref<4x128xf32, #tpu.memory_space<vmem>>, vector<1x128xf32>
    %71 = vector.broadcast %70 : vector<1x128xf32> to vector<8x128xf32>
    %72 = arith.addf %69, %71 : vector<8x128xf32>
    %c0_18 = arith.constant 0 : index
    %c0_19 = arith.constant 0 : index
    %73 = vector.load %arg4[%c0_18, %c0_19] : memref<8x128xf32, #tpu.memory_space<vmem>>, vector<8x128xf32>
    tpu.vector_store %arg4[%c0_18, %c0_19], %72 {strides = array<i32>} : memref<8x128xf32, #tpu.memory_space<vmem>>, vector<8x128xf32>,
    return
  }
  func.func @transform_0(%arg0: i32) -> (i32, i32) {
    %c0_i32 = arith.constant 0 : i32
    %c0_i32_0 = arith.constant 0 : i32
    return %arg0, %c0_i32 : i32, i32
  }
  func.func @transform_1(%arg0: i32) -> (i32, i32) {
    %c0_i32 = arith.constant 0 : i32
    %c0_i32_0 = arith.constant 0 : i32
    %c0_i32_1 = arith.constant 0 : i32
    return %c0_i32, %c0_i32_0 : i32, i32
  }
  func.func @transform_2(%arg0: i32) -> (i32, i32) {
    %c0_i32 = arith.constant 0 : i32
    %c0_i32_0 = arith.constant 0 : i32
    %c0_i32_1 = arith.constant 0 : i32
    return %c0_i32, %c0_i32_0 : i32, i32
  }
  func.func @transform_3(%arg0: i32) -> (i32, i32) {
    %c0_i32 = arith.constant 0 : i32
    %c0_i32_0 = arith.constant 0 : i32
    return %arg0, %c0_i32 : i32, i32
  }
}

</mosaic_0001>

<llo_original>
// kernel: next_char_forward.1
$region0: #{next_char_forward.1}
  #allocation0 [shape = 'u32[]', space=smem, size = 0x4, offset = 0x4, fixed_abs, tag = 'smem constant byte address 0x4 - core index']
  #allocation1 [shape = 'u32[144,128]{1,0:T(1,128)}', space=vmem, size = 0x12000, scoped, tag = 'internal scratch']
  %s0 = inlined_call_operand.hbm [shape: s32[8,5], index: 0, kind: input, shape index: {}]
  %s1 = inlined_call_operand.hbm [shape: bf16[640,128], index: 1, kind: input, shape index: {}]
  %s2 = inlined_call_operand.hbm [shape: f32[4,128], index: 2, kind: input, shape index: {}]
  %s3 = inlined_call_operand.hbm [shape: f32[8,128], index: 3, kind: output, shape index: {}]
  %s4 = sld [smem:[#allocation0]]
  $region34: #{next_char_forward.1} parent=0
    _
  %s6 = ssub.s32 1, %s4
  %s7 = scalar_select 0, %s6, %s4
  $region1: #{next_char_forward.1} parent=0
    #allocation2 [shape = 'u8[4096]{0}', space=vmem, size = 0x1000, scoped, tag = 'input window, operand 0, single buffered']
    #allocation3 [shape = 's32[1]{0}', space=sflag, size = 0x4, scoped, tag = 'scoped memory for next_char_forward.1']
    #allocation4 [shape = 's32[1]{0}', space=sflag, size = 0x4, scoped, tag = 'scoped memory for next_char_forward.1']
    #allocation5 [shape = 'u8[163840]{0}', space=vmem, size = 0x28000, scoped, tag = 'input window, operand 1, single buffered']
    #allocation6 [shape = 's32[1]{0}', space=sflag, size = 0x4, scoped, tag = 'scoped memory for next_char_forward.1']
    #allocation7 [shape = 'u8[2048]{0}', space=vmem, size = 0x800, scoped, tag = 'input window, operand 2, single buffered']
    #allocation8 [shape = 'u8[4096]{0}', space=vmem, size = 0x1000, scoped, tag = 'output window, operand 0, single buffered']
    %8 = vsyncpa [#allocation3], 0
    %9 = vsyncpa [#allocation6], 0
    %10 = vsyncpa [#allocation4], 0
    // Predicated region
    $region2: #{next_char_forward.1} parent=1 // pred_check
      _
    $region3: #{next_char_forward.1} parent=1 // pred_check_branch
      %12 = sbr.rel (0) target = $region5
    $region4: #{next_char_forward.1} parent=1 // pred_region
      %s14 = ssub.s32 128, 128
      %15 = vsyncadd [#allocation3], %s14
      %s17 = sshll.u32 [#allocation2], 4
      %s18 = int_to_ptr.vmem [resolvable:$true] %s17
      %20 = dma.hbm_to_vmem [thread:$0]  %s0, 128, %s18, [#allocation3]
    $region5: #{next_char_forward.1} parent=1 // pred_fallthru
      _
    // Predicated region
    $region6: #{next_char_forward.1} parent=1 // pred_check
      _
    $region7: #{next_char_forward.1} parent=1 // pred_check_branch
      %22 = sbr.rel (0) target = $region9
    $region8: #{next_char_forward.1} parent=1 // pred_region
      %s24 = ssub.s32 5120, 5120
      %25 = vsyncadd [#allocation6], %s24
      %s26 = sshll.u32 [#allocation5], 4
      %s27 = int_to_ptr.vmem [resolvable:$true] %s26
      %32 = dma.hbm_to_vmem [thread:$0]  %s1, 5120, %s27, [#allocation6], 64, 64, 4
    $region9: #{next_char_forward.1} parent=1 // pred_fallthru
      _
    // Predicated region
    $region10: #{next_char_forward.1} parent=1 // pred_check
      _
    $region11: #{next_char_forward.1} parent=1 // pred_check_branch
      %34 = sbr.rel (0) target = $region13
    $region12: #{next_char_forward.1} parent=1 // pred_region
      %s36 = ssub.s32 64, 64
      %37 = vsyncadd [#allocation6], %s36
      %s39 = sshll.u32 [#allocation7], 4
      %s40 = int_to_ptr.vmem [resolvable:$true] %s39
      %42 = dma.hbm_to_vmem [thread:$0]  %s2, 64, %s40, [#allocation6]
    $region13: #{next_char_forward.1} parent=1 // pred_fallthru
      _
    // Predicated region
    $region14: #{next_char_forward.1} parent=1 // pred_check
      _
    $region15: #{next_char_forward.1} parent=1 // pred_check_branch
      %44 = sbr.rel (0) target = $region17
    $region16: #{next_char_forward.1} parent=1 // pred_region
      %45 = dma.done [#allocation3], 128
    $region17: #{next_char_forward.1} parent=1 // pred_fallthru
      _
    // Predicated region
    $region18: #{next_char_forward.1} parent=1 // pred_check
      _
    $region19: #{next_char_forward.1} parent=1 // pred_check_branch
      %47 = sbr.rel (0) target = $region21
    $region20: #{next_char_forward.1} parent=1 // pred_region
      %48 = dma.done [#allocation6], 5120
    $region21: #{next_char_forward.1} parent=1 // pred_fallthru
      _
    // Predicated region
    $region22: #{next_char_forward.1} parent=1 // pred_check
      _
    $region23: #{next_char_forward.1} parent=1 // pred_check_branch
      %50 = sbr.rel (0) target = $region25
    $region24: #{next_char_forward.1} parent=1 // pred_region
      %51 = dma.done [#allocation6], 64
    $region25: #{next_char_forward.1} parent=1 // pred_fallthru
      _
    %v53 = vld [vmem:[#allocation2] sm:$0xff]
    %v54 = vlaneseq
    %v55 = vand.u32 %v54, 127
    %v56 = vadd.s32 %v55, 128
    %57 = vset.pattern.permute.xlu0 0
    %58 = vperm.xlu0 %57, %v53
    %v59 = vpop.permute.xlu0 %58
    %vm60 = vcmp.eq.s32.totalorder %v55, %v59
    %vm61 = vcmp.eq.s32.totalorder %v56, %v59
    %v62 = vsel %vm60, 1, 0
    %v63 = vsel %vm61, 1, 0
    %v64 = vcvt.s32.f32 %v62
    %v65 = vcvt.s32.f32 %v63
    %v66 = vadd.f32 %v64, 0.0
    %v67 = vadd.f32 %v65, 0.0
    %v68 = vadd.s32 %v53, 32
    %69 = vset.pattern.permute.xlu0 1
    %70 = vperm.xlu0 %69, %v68
    %v71 = vpop.permute.xlu0 %70
    %vm72 = vcmp.eq.s32.totalorder %v55, %v71
    %vm73 = vcmp.eq.s32.totalorder %v56, %v71
    %v74 = vsel %vm72, 1, 0
    %v75 = vsel %vm73, 1, 0
    %v76 = vcvt.s32.f32 %v74
    %v77 = vcvt.s32.f32 %v75
    %v78 = vadd.f32 %v66, %v76
    %v79 = vadd.f32 %v67, %v77
    %v80 = vadd.s32 %v53, 64
    %81 = vset.pattern.permute.xlu0 2
    %82 = vperm.xlu0 %81, %v80
    %v83 = vpop.permute.xlu0 %82
    %vm84 = vcmp.eq.s32.totalorder %v55, %v83
    %vm85 = vcmp.eq.s32.totalorder %v56, %v83
    %v86 = vsel %vm84, 1, 0
    %v87 = vsel %vm85, 1, 0
    %v88 = vcvt.s32.f32 %v86
    %v89 = vcvt.s32.f32 %v87
    %v90 = vadd.f32 %v78, %v88
    %v91 = vadd.f32 %v79, %v89
    %v92 = vadd.s32 %v53, 96
    %93 = vset.pattern.permute.xlu0 3
    %94 = vperm.xlu0 %93, %v92
    %v95 = vpop.permute.xlu0 %94
    %vm96 = vcmp.eq.s32.totalorder %v55, %v95
    %vm97 = vcmp.eq.s32.totalorder %v56, %v95
    %v98 = vsel %vm96, 1, 0
    %v99 = vsel %vm97, 1, 0
    %v100 = vcvt.s32.f32 %v98
    %v101 = vcvt.s32.f32 %v99
    %v102 = vadd.f32 %v90, %v100
    %v103 = vadd.f32 %v91, %v101
    %v104 = vadd.s32 %v53, 128
    %105 = vset.pattern.permute.xlu0 4
    %106 = vperm.xlu0 %105, %v104
    %v107 = vpop.permute.xlu0 %106
    %vm108 = vcmp.eq.s32.totalorder %v55, %v107
    %vm109 = vcmp.eq.s32.totalorder %v56, %v107
    %v110 = vsel %vm108, 1, 0
    %v111 = vsel %vm109, 1, 0
    %v112 = vcvt.s32.f32 %v110
    %v113 = vcvt.s32.f32 %v111
    %v114 = vadd.f32 %v102, %v112
    %v115 = vadd.f32 %v103, %v113
    %v116 = vpack.c.bf16 %v114, %v114
    %v117 = vpack.c.bf16 %v115, %v115
    %v118 = vld [vmem:[#allocation5] sm:$0xf]
    %v119 = vld [vmem:[#allocation5 + $0x4] sm:$0xf]
    %v120 = vld [vmem:[#allocation5 + $0x8] sm:$0xf]
    %v121 = vld [vmem:[#allocation5 + $0xc] sm:$0xf]
    %v122 = vld [vmem:[#allocation5 + $0x10] sm:$0xf]
    %v123 = vld [vmem:[#allocation5 + $0x14] sm:$0xf]
    %v124 = vld [vmem:[#allocation5 + $0x18] sm:$0xf]
    %v125 = vld [vmem:[#allocation5 + $0x1c] sm:$0xf]
    %v126 = vld [vmem:[#allocation5 + $0x20] sm:$0xf]
    %v127 = vld [vmem:[#allocation5 + $0x24] sm:$0xf]
    %v128 = vld [vmem:[#allocation5 + $0x28] sm:$0xf]
    %v129 = vld [vmem:[#allocation5 + $0x2c] sm:$0xf]
    %v130 = vld [vmem:[#allocation5 + $0x30] sm:$0xf]
    %v131 = vld [vmem:[#allocation5 + $0x34] sm:$0xf]
    %v132 = vld [vmem:[#allocation5 + $0x38] sm:$0xf]
    %v133 = vld [vmem:[#allocation5 + $0x3c] sm:$0xf]
    %v134 = vld [vmem:[#allocation5 + $0x40] sm:$0xf]
    %v135 = vld [vmem:[#allocation5 + $0x44] sm:$0xf]
    %v136 = vld [vmem:[#allocation5 + $0x48] sm:$0xf]
    %v137 = vld [vmem:[#allocation5 + $0x4c] sm:$0xf]
    %v138 = vld [vmem:[#allocation5 + $0x50] sm:$0xf]
    %v139 = vld [vmem:[#allocation5 + $0x54] sm:$0xf]
    %v140 = vld [vmem:[#allocation5 + $0x58] sm:$0xf]
    %v141 = vld [vmem:[#allocation5 + $0x5c] sm:$0xf]
    %v142 = vld [vmem:[#allocation5 + $0x60] sm:$0xf]
    %v143 = vld [vmem:[#allocation5 + $0x64] sm:$0xf]
    %v144 = vld [vmem:[#allocation5 + $0x68] sm:$0xf]
    %v145 = vld [vmem:[#allocation5 + $0x6c] sm:$0xf]
    %v146 = vld [vmem:[#allocation5 + $0x70] sm:$0xf]
    %v147 = vld [vmem:[#allocation5 + $0x74] sm:$0xf]
    %v148 = vld [vmem:[#allocation5 + $0x78] sm:$0xf]
    %v149 = vld [vmem:[#allocation5 + $0x7c] sm:$0xf]
    %v150 = vld [vmem:[#allocation7] sm:$0x1]
    %v151 = vlaneseq
    %v152 = vshrl.u32 %v151, 7
    %v153 = vsub.s32 0, %v152
    %v154 = vrot.slane %v150, %v153
    %v187 = vunpack.c.l.b16 %v118
    %v188 = vunpack.c.l.b16 %v119
    %v189 = vunpack.c.l.b16 %v120
    %v190 = vunpack.c.l.b16 %v121
    %v191 = vunpack.c.l.b16 %v122
    %v192 = vunpack.c.l.b16 %v123
    %v193 = vunpack.c.l.b16 %v124
    %v194 = vunpack.c.l.b16 %v125
    %v195 = vunpack.c.l.b16 %v126
    %v196 = vunpack.c.l.b16 %v127
    %v197 = vunpack.c.l.b16 %v128
    %v198 = vunpack.c.l.b16 %v129
    %v199 = vunpack.c.l.b16 %v130
    %v200 = vunpack.c.l.b16 %v131
    %v201 = vunpack.c.l.b16 %v132
    %v202 = vunpack.c.l.b16 %v133
    %v203 = vunpack.c.l.b16 %v134
    %v204 = vunpack.c.l.b16 %v135
    %v205 = vunpack.c.l.b16 %v136
    %v206 = vunpack.c.l.b16 %v137
    %v207 = vunpack.c.l.b16 %v138
    %v208 = vunpack.c.l.b16 %v139
    %v209 = vunpack.c.l.b16 %v140
    %v210 = vunpack.c.l.b16 %v141
    %v211 = vunpack.c.l.b16 %v142
    %v212 = vunpack.c.l.b16 %v143
    %v213 = vunpack.c.l.b16 %v144
    %v214 = vunpack.c.l.b16 %v145
    %v215 = vunpack.c.l.b16 %v146
    %v216 = vunpack.c.l.b16 %v147
    %v217 = vunpack.c.l.b16 %v148
    %v218 = vunpack.c.l.b16 %v149
    %v219 = vpack.c.b16 %v188, %v187
    %v220 = vpack.c.b16 %v190, %v189
    %v221 = vpack.c.b16 %v192, %v191
    %v222 = vpack.c.b16 %v194, %v193
    %v223 = vpack.c.b16 %v196, %v195
    %v224 = vpack.c.b16 %v198, %v197
    %v225 = vpack.c.b16 %v200, %v199
    %v226 = vpack.c.b16 %v202, %v201
    %v227 = vpack.c.b16 %v204, %v203
    %v228 = vpack.c.b16 %v206, %v205
    %v229 = vpack.c.b16 %v208, %v207
    %v230 = vpack.c.b16 %v210, %v209
    %v231 = vpack.c.b16 %v212, %v211
    %v232 = vpack.c.b16 %v214, %v213
    %v233 = vpack.c.b16 %v216, %v215
    %v234 = vpack.c.b16 %v218, %v217
    %251 = vmatprep.subr.bf16.mxu0 0
    %252 = vmatpush1.bf16.msra.mxu0 %v219
    %253 = vmatprep.subr.bf16.mxu0 0
    %254 = vmatpush1.bf16.msra.mxu0 %v220
    %255 = vmatprep.subr.bf16.mxu0 0
    %256 = vmatpush1.bf16.msra.mxu0 %v221
    %257 = vmatprep.subr.bf16.mxu0 0
    %258 = vmatpush1.bf16.msra.mxu0 %v222
    %259 = vmatprep.subr.bf16.mxu0 0
    %260 = vmatpush1.bf16.msra.mxu0 %v223
    %261 = vmatprep.subr.bf16.mxu0 0
    %262 = vmatpush1.bf16.msra.mxu0 %v224
    %263 = vmatprep.subr.bf16.mxu0 0
    %264 = vmatpush1.bf16.msra.mxu0 %v225
    %265 = vmatprep.subr.bf16.mxu0 0
    %266 = vmatpush1.bf16.msra.mxu0 %v226
    %267 = vmatprep.subr.bf16.mxu0 0
    %268 = vmatpush1.bf16.msra.mxu0 %v227
    %269 = vmatprep.subr.bf16.mxu0 0
    %270 = vmatpush1.bf16.msra.mxu0 %v228
    %271 = vmatprep.subr.bf16.mxu0 0
    %272 = vmatpush1.bf16.msra.mxu0 %v229
    %273 = vmatprep.subr.bf16.mxu0 0
    %274 = vmatpush1.bf16.msra.mxu0 %v230
    %275 = vmatprep.subr.bf16.mxu0 0
    %276 = vmatpush1.bf16.msra.mxu0 %v231
    %277 = vmatprep.subr.bf16.mxu0 0
    %278 = vmatpush1.bf16.msra.mxu0 %v232
    %279 = vmatprep.subr.bf16.mxu0 0
    %280 = vmatpush1.bf16.msra.mxu0 %v233
    %281 = vmatprep.subr.bf16.mxu0 0
    %282 = vmatpush1.bf16.msra.mxu0 %v234
    %283 = vmatprep.mubr.bf16.mxu0 %v117
    %284 = vmatmul.mubr.bf16.gmra.mrb[0].mxu0 %v116
    %v285 = vpop.f32.mrb[0].mxu0
    %v286 = vadd.f32 %v154, %v285
    %v287 = vpop.f32.mrb[0].mxu0
    %v288 = vpop.f32.mrb[0].mxu0
    %v289 = vpop.f32.mrb[0].mxu0
    %290 = vdwg.mxu0
    %v291 = vmax.f32 %v286, 0.0
    %v292 = vpack.c.bf16 %v291, %v291
    %v293 = vld [vmem:[#allocation5 + $0x80] sm:$0xf]
    %v294 = vld [vmem:[#allocation5 + $0x84] sm:$0xf]
    %v295 = vld [vmem:[#allocation5 + $0x88] sm:$0xf]
    %v296 = vld [vmem:[#allocation5 + $0x8c] sm:$0xf]
    %v297 = vld [vmem:[#allocation5 + $0x90] sm:$0xf]
    %v298 = vld [vmem:[#allocation5 + $0x94] sm:$0xf]
    %v299 = vld [vmem:[#allocation5 + $0x98] sm:$0xf]
    %v300 = vld [vmem:[#allocation5 + $0x9c] sm:$0xf]
    %v301 = vld [vmem:[#allocation5 + $0xa0] sm:$0xf]
    %v302 = vld [vmem:[#allocation5 + $0xa4] sm:$0xf]
    %v303 = vld [vmem:[#allocation5 + $0xa8] sm:$0xf]
    %v304 = vld [vmem:[#allocation5 + $0xac] sm:$0xf]
    %v305 = vld [vmem:[#allocation5 + $0xb0] sm:$0xf]
    %v306 = vld [vmem:[#allocation5 + $0xb4] sm:$0xf]
    %v307 = vld [vmem:[#allocation5 + $0xb8] sm:$0xf]
    %v308 = vld [vmem:[#allocation5 + $0xbc] sm:$0xf]
    %v309 = vld [vmem:[#allocation7 + $0x1] sm:$0x1]
    %v310 = vlaneseq
    %v311 = vshrl.u32 %v310, 7
    %v312 = vsub.s32 0, %v311
    %v313 = vrot.slane %v309, %v312
    %v330 = vunpack.c.l.b16 %v293
    %v331 = vunpack.c.l.b16 %v294
    %v332 = vunpack.c.l.b16 %v295
    %v333 = vunpack.c.l.b16 %v296
    %v334 = vunpack.c.l.b16 %v297
    %v335 = vunpack.c.l.b16 %v298
    %v336 = vunpack.c.l.b16 %v299
    %v337 = vunpack.c.l.b16 %v300
    %v338 = vunpack.c.l.b16 %v301
    %v339 = vunpack.c.l.b16 %v302
    %v340 = vunpack.c.l.b16 %v303
    %v341 = vunpack.c.l.b16 %v304
    %v342 = vunpack.c.l.b16 %v305
    %v343 = vunpack.c.l.b16 %v306
    %v344 = vunpack.c.l.b16 %v307
    %v345 = vunpack.c.l.b16 %v308
    %v346 = vpack.c.b16 %v331, %v330
    %v347 = vpack.c.b16 %v333, %v332
    %v348 = vpack.c.b16 %v335, %v334
    %v349 = vpack.c.b16 %v337, %v336
    %v350 = vpack.c.b16 %v339, %v338
    %v351 = vpack.c.b16 %v341, %v340
    %v352 = vpack.c.b16 %v343, %v342
    %v353 = vpack.c.b16 %v345, %v344
    %362 = vmatprep.subr.bf16.mxu0 0
    %363 = vmatpush1.bf16.msra.mxu0 %v346
    %364 = vmatprep.subr.bf16.mxu0 0
    %365 = vmatpush1.bf16.msra.mxu0 %v347
    %366 = vmatprep.subr.bf16.mxu0 0
    %367 = vmatpush1.bf16.msra.mxu0 %v348
    %368 = vmatprep.subr.bf16.mxu0 0
    %369 = vmatpush1.bf16.msra.mxu0 %v349
    %370 = vmatprep.subr.bf16.mxu0 0
    %371 = vmatpush1.bf16.msra.mxu0 %v350
    %372 = vmatprep.subr.bf16.mxu0 0
    %373 = vmatpush1.bf16.msra.mxu0 %v351
    %374 = vmatprep.subr.bf16.mxu0 0
    %375 = vmatpush1.bf16.msra.mxu0 %v352
    %376 = vmatprep.subr.bf16.mxu0 0
    %377 = vmatpush1.bf16.msra.mxu0 %v353
    %378 = vmatprep.subr.bf16.mxu0 0
    %379 = vmatpush1.bf16.msra.mxu0 0
    %380 = vmatprep.subr.bf16.mxu0 0
    %381 = vmatpush1.bf16.msra.mxu0 0
    %382 = vmatprep.subr.bf16.mxu0 0
    %383 = vmatpush1.bf16.msra.mxu0 0
    %384 = vmatprep.subr.bf16.mxu0 0
    %385 = vmatpush1.bf16.msra.mxu0 0
    %386 = vmatprep.subr.bf16.mxu0 0
    %387 = vmatpush1.bf16.msra.mxu0 0
    %388 = vmatprep.subr.bf16.mxu0 0
    %389 = vmatpush1.bf16.msra.mxu0 0
    %390 = vmatprep.subr.bf16.mxu0 0
    %391 = vmatpush1.bf16.msra.mxu0 0
    %392 = vmatprep.subr.bf16.mxu0 0
    %393 = vmatpush1.bf16.msra.mxu0 0
    %394 = vmatprep.mubr.bf16.mxu0 0
    %395 = vmatmul.mubr.bf16.gmra.mrb[0].mxu0 %v292
    %v396 = vpop.f32.mrb[0].mxu0
    %v397 = vadd.f32 %v313, %v396
    %v398 = vpop.f32.mrb[0].mxu0
    %v399 = vpop.f32.mrb[0].mxu0
    %v400 = vpop.f32.mrb[0].mxu0
    %401 = vdwg.mxu0
    %v402 = vmax.f32 %v397, 0.0
    %v403 = vpack.c.bf16 %v402, %v402
    %v404 = vld [vmem:[#allocation5 + $0xc0] sm:$0xf]
    %v405 = vld [vmem:[#allocation5 + $0xc4] sm:$0xf]
    %v406 = vld [vmem:[#allocation5 + $0xc8] sm:$0xf]
    %v407 = vld [vmem:[#allocation5 + $0xcc] sm:$0xf]
    %v408 = vld [vmem:[#allocation5 + $0xd0] sm:$0xf]
    %v409 = vld [vmem:[#allocation5 + $0xd4] sm:$0xf]
    %v410 = vld [vmem:[#allocation5 + $0xd8] sm:$0xf]
    %v411 = vld [vmem:[#allocation5 + $0xdc] sm:$0xf]
    %v412 = vld [vmem:[#allocation5 + $0xe0] sm:$0xf]
    %v413 = vld [vmem:[#allocation5 + $0xe4] sm:$0xf]
    %v414 = vld [vmem:[#allocation5 + $0xe8] sm:$0xf]
    %v415 = vld [vmem:[#allocation5 + $0xec] sm:$0xf]
    %v416 = vld [vmem:[#allocation5 + $0xf0] sm:$0xf]
    %v417 = vld [vmem:[#allocation5 + $0xf4] sm:$0xf]
    %v418 = vld [vmem:[#allocation5 + $0xf8] sm:$0xf]
    %v419 = vld [vmem:[#allocation5 + $0xfc] sm:$0xf]
    %v420 = vld [vmem:[#allocation7 + $0x2] sm:$0x1]
    %v421 = vlaneseq
    %v422 = vshrl.u32 %v421, 7
    %v423 = vsub.s32 0, %v422
    %v424 = vrot.slane %v420, %v423
    %v441 = vunpack.c.l.b16 %v404
    %v442 = vunpack.c.l.b16 %v405
    %v443 = vunpack.c.l.b16 %v406
    %v444 = vunpack.c.l.b16 %v407
    %v445 = vunpack.c.l.b16 %v408
    %v446 = vunpack.c.l.b16 %v409
    %v447 = vunpack.c.l.b16 %v410
    %v448 = vunpack.c.l.b16 %v411
    %v449 = vunpack.c.l.b16 %v412
    %v450 = vunpack.c.l.b16 %v413
    %v451 = vunpack.c.l.b16 %v414
    %v452 = vunpack.c.l.b16 %v415
    %v453 = vunpack.c.l.b16 %v416
    %v454 = vunpack.c.l.b16 %v417
    %v455 = vunpack.c.l.b16 %v418
    %v456 = vunpack.c.l.b16 %v419
    %v457 = vpack.c.b16 %v442, %v441
    %v458 = vpack.c.b16 %v444, %v443
    %v459 = vpack.c.b16 %v446, %v445
    %v460 = vpack.c.b16 %v448, %v447
    %v461 = vpack.c.b16 %v450, %v449
    %v462 = vpack.c.b16 %v452, %v451
    %v463 = vpack.c.b16 %v454, %v453
    %v464 = vpack.c.b16 %v456, %v455
    %473 = vmatprep.subr.bf16.mxu0 0
    %474 = vmatpush1.bf16.msra.mxu0 %v457
    %475 = vmatprep.subr.bf16.mxu0 0
    %476 = vmatpush1.bf16.msra.mxu0 %v458
    %477 = vmatprep.subr.bf16.mxu0 0
    %478 = vmatpush1.bf16.msra.mxu0 %v459
    %479 = vmatprep.subr.bf16.mxu0 0
    %480 = vmatpush1.bf16.msra.mxu0 %v460
    %481 = vmatprep.subr.bf16.mxu0 0
    %482 = vmatpush1.bf16.msra.mxu0 %v461
    %483 = vmatprep.subr.bf16.mxu0 0
    %484 = vmatpush1.bf16.msra.mxu0 %v462
    %485 = vmatprep.subr.bf16.mxu0 0
    %486 = vmatpush1.bf16.msra.mxu0 %v463
    %487 = vmatprep.subr.bf16.mxu0 0
    %488 = vmatpush1.bf16.msra.mxu0 %v464
    %489 = vmatprep.subr.bf16.mxu0 0
    %490 = vmatpush1.bf16.msra.mxu0 0
    %491 = vmatprep.subr.bf16.mxu0 0
    %492 = vmatpush1.bf16.msra.mxu0 0
    %493 = vmatprep.subr.bf16.mxu0 0
    %494 = vmatpush1.bf16.msra.mxu0 0
    %495 = vmatprep.subr.bf16.mxu0 0
    %496 = vmatpush1.bf16.msra.mxu0 0
    %497 = vmatprep.subr.bf16.mxu0 0
    %498 = vmatpush1.bf16.msra.mxu0 0
    %499 = vmatprep.subr.bf16.mxu0 0
    %500 = vmatpush1.bf16.msra.mxu0 0
    %501 = vmatprep.subr.bf16.mxu0 0
    %502 = vmatpush1.bf16.msra.mxu0 0
    %503 = vmatprep.subr.bf16.mxu0 0
    %504 = vmatpush1.bf16.msra.mxu0 0
    %505 = vmatprep.mubr.bf16.mxu0 0
    %506 = vmatmul.mubr.bf16.gmra.mrb[0].mxu0 %v403
    %v507 = vpop.f32.mrb[0].mxu0
    %v508 = vadd.f32 %v424, %v507
    %v509 = vpop.f32.mrb[0].mxu0
    %v510 = vpop.f32.mrb[0].mxu0
    %v511 = vpop.f32.mrb[0].mxu0
    %512 = vdwg.mxu0
    %v513 = vmax.f32 %v508, 0.0
    %v514 = vpack.c.bf16 %v513, %v513
    %v515 = vld [vmem:[#allocation5 + $0x100] sm:$0xf]
    %v516 = vld [vmem:[#allocation5 + $0x104] sm:$0xf]
    %v517 = vld [vmem:[#allocation5 + $0x108] sm:$0xf]
    %v518 = vld [vmem:[#allocation5 + $0x10c] sm:$0xf]
    %v519 = vld [vmem:[#allocation5 + $0x110] sm:$0xf]
    %v520 = vld [vmem:[#allocation5 + $0x114] sm:$0xf]
    %v521 = vld [vmem:[#allocation5 + $0x118] sm:$0xf]
    %v522 = vld [vmem:[#allocation5 + $0x11c] sm:$0xf]
    %v523 = vld [vmem:[#allocation5 + $0x120] sm:$0xf]
    %v524 = vld [vmem:[#allocation5 + $0x124] sm:$0xf]
    %v525 = vld [vmem:[#allocation5 + $0x128] sm:$0xf]
    %v526 = vld [vmem:[#allocation5 + $0x12c] sm:$0xf]
    %v527 = vld [vmem:[#allocation5 + $0x130] sm:$0xf]
    %v528 = vld [vmem:[#allocation5 + $0x134] sm:$0xf]
    %v529 = vld [vmem:[#allocation5 + $0x138] sm:$0xf]
    %v530 = vld [vmem:[#allocation5 + $0x13c] sm:$0xf]
    %v531 = vld [vmem:[#allocation7 + $0x3] sm:$0x1]
    %v532 = vlaneseq
    %v533 = vshrl.u32 %v532, 7
    %v534 = vsub.s32 0, %v533
    %v535 = vrot.slane %v531, %v534
    %v552 = vunpack.c.l.b16 %v515
    %v553 = vunpack.c.l.b16 %v516
    %v554 = vunpack.c.l.b16 %v517
    %v555 = vunpack.c.l.b16 %v518
    %v556 = vunpack.c.l.b16 %v519
    %v557 = vunpack.c.l.b16 %v520
    %v558 = vunpack.c.l.b16 %v521
    %v559 = vunpack.c.l.b16 %v522
    %v560 = vunpack.c.l.b16 %v523
    %v561 = vunpack.c.l.b16 %v524
    %v562 = vunpack.c.l.b16 %v525
    %v563 = vunpack.c.l.b16 %v526
    %v564 = vunpack.c.l.b16 %v527
    %v565 = vunpack.c.l.b16 %v528
    %v566 = vunpack.c.l.b16 %v529
    %v567 = vunpack.c.l.b16 %v530
    %v568 = vpack.c.b16 %v553, %v552
    %v569 = vpack.c.b16 %v555, %v554
    %v570 = vpack.c.b16 %v557, %v556
    %v571 = vpack.c.b16 %v559, %v558
    %v572 = vpack.c.b16 %v561, %v560
    %v573 = vpack.c.b16 %v563, %v562
    %v574 = vpack.c.b16 %v565, %v564
    %v575 = vpack.c.b16 %v567, %v566
    %584 = vmatprep.subr.bf16.mxu0 0
    %585 = vmatpush1.bf16.msra.mxu0 %v568
    %586 = vmatprep.subr.bf16.mxu0 0
    %587 = vmatpush1.bf16.msra.mxu0 %v569
    %588 = vmatprep.subr.bf16.mxu0 0
    %589 = vmatpush1.bf16.msra.mxu0 %v570
    %590 = vmatprep.subr.bf16.mxu0 0
    %591 = vmatpush1.bf16.msra.mxu0 %v571
    %592 = vmatprep.subr.bf16.mxu0 0
    %593 = vmatpush1.bf16.msra.mxu0 %v572
    %594 = vmatprep.subr.bf16.mxu0 0
    %595 = vmatpush1.bf16.msra.mxu0 %v573
    %596 = vmatprep.subr.bf16.mxu0 0
    %597 = vmatpush1.bf16.msra.mxu0 %v574
    %598 = vmatprep.subr.bf16.mxu0 0
    %599 = vmatpush1.bf16.msra.mxu0 %v575
    %600 = vmatprep.subr.bf16.mxu0 0
    %601 = vmatpush1.bf16.msra.mxu0 0
    %602 = vmatprep.subr.bf16.mxu0 0
    %603 = vmatpush1.bf16.msra.mxu0 0
    %604 = vmatprep.subr.bf16.mxu0 0
    %605 = vmatpush1.bf16.msra.mxu0 0
    %606 = vmatprep.subr.bf16.mxu0 0
    %607 = vmatpush1.bf16.msra.mxu0 0
    %608 = vmatprep.subr.bf16.mxu0 0
    %609 = vmatpush1.bf16.msra.mxu0 0
    %610 = vmatprep.subr.bf16.mxu0 0
    %611 = vmatpush1.bf16.msra.mxu0 0
    %612 = vmatprep.subr.bf16.mxu0 0
    %613 = vmatpush1.bf16.msra.mxu0 0
    %614 = vmatprep.subr.bf16.mxu0 0
    %615 = vmatpush1.bf16.msra.mxu0 0
    %616 = vmatprep.mubr.bf16.mxu0 0
    %617 = vmatmul.mubr.bf16.gmra.mrb[0].mxu0 %v514
    %v618 = vpop.f32.mrb[0].mxu0
    %v619 = vadd.f32 %v535, %v618
    %v620 = vpop.f32.mrb[0].mxu0
    %v621 = vpop.f32.mrb[0].mxu0
    %v622 = vpop.f32.mrb[0].mxu0
    %623 = vdwg.mxu0
    %624 = vst [vmem:[#allocation8] sm:$0xff] %v619
    // Predicated region
    $region26: #{next_char_forward.1} parent=1 // pred_check
      _
    $region27: #{next_char_forward.1} parent=1 // pred_check_branch
      %626 = sbr.rel (0) target = $region29
    $region28: #{next_char_forward.1} parent=1 // pred_region
      %s628 = ssub.s32 128, 128
      %629 = vsyncadd [#allocation4], %s628
      %s631 = sshll.u32 [#allocation8], 4
      %s632 = int_to_ptr.vmem [resolvable:$true] %s631
      %634 = dma.vmem_to_hbm [thread:$0]  %s632, 128, %s3, [#allocation4]
    $region29: #{next_char_forward.1} parent=1 // pred_fallthru
      _
    // Predicated region
    $region30: #{next_char_forward.1} parent=1 // pred_check
      _
    $region31: #{next_char_forward.1} parent=1 // pred_check_branch
      %636 = sbr.rel (0) target = $region33
    $region32: #{next_char_forward.1} parent=1 // pred_region
      %637 = dma.done [#allocation4], 128
    $region33: #{next_char_forward.1} parent=1 // pred_fallthru
      _
    %638 = vsyncpa [#allocation3], 1
    %639 = vsyncpa [#allocation6], 1
    %640 = vsyncpa [#allocation4], 1

</llo_original>
